<compile_context>
chip_gen: v6e
topology: v6e:2x2x1
jax: 0.10.0
libtpu: 0.0.40
codegen_flags: <defaults>
</compile_context>

<pallas_src>
import jax
import jax.numpy as jnp
from jax.experimental import pallas as pl
from jax.experimental.pallas import tpu as pltpu


def _round_up(x, m):
    return (x + m - 1) // m * m


def feature_tokenizer_kernel(x_num_ref, x_cat_ref, w_num_ref, b_num_ref,
                             emb_ref, cls_ref, out_ref):
    # x_num_ref: (TB, Fn) f32          x_cat_ref: (TB, Fc) i32 (global packed rows)
    # w_num_ref/b_num_ref: (1, Fn*D)   emb_ref: (V_pad, D)      cls_ref: (1, D)
    # out_ref:   (TB, T*D) f32, token order [CLS, num..., cat...]
    tb, f_num = x_num_ref.shape
    f_cat = x_cat_ref.shape[1]
    v, d = emb_ref.shape

    # ---- group 1: [CLS | numerical tokens] -- one lane-dense FMA, one store ----
    x_num = x_num_ref[...]                                           # (TB, Fn)
    x_rep = jnp.concatenate(
        [jnp.broadcast_to(x_num[:, f:f + 1], (tb, d)) for f in range(f_num)],
        axis=-1)                                                     # (TB, Fn*D)
    num_slab = x_rep * w_num_ref[...] + b_num_ref[...]               # (TB, Fn*D)
    cls_blk = jnp.broadcast_to(cls_ref[...], (tb, d))                # (TB, D)
    out_ref[:, :(1 + f_num) * d] = jnp.concatenate([cls_blk, num_slab], axis=-1)

    # ---- group 2: categorical tokens -- vectorized one-hot x MXU row gather ----
    emb = emb_ref[...]                                               # (V_pad, D)
    idx = x_cat_ref[...]                                             # (TB, Fc)
    col = jax.lax.broadcasted_iota(jnp.int32, (tb, v), 1)            # (TB, V_pad)
    cat_slab = jnp.concatenate(
        [jnp.dot((idx[:, j:j + 1] == col).astype(emb.dtype), emb,
                 preferred_element_type=jnp.float32)
         for j in range(f_cat)],
        axis=-1)                                                     # (TB, Fc*D)
    out_ref[:, (1 + f_num) * d:] = cat_slab


def feature_tokenizer(x_num, x_cat, w_num, b_num, emb_all, cat_offsets,
                      cls_token, *, tb=None):
    B, Fn = x_num.shape
    Fc = x_cat.shape[1]
    V, D = emb_all.shape
    T = 1 + Fn + Fc

    # Global row indices in the packed table.
    # NOTE: PyTorch nn.Embedding raises on out-of-range indices; this kernel has
    # no bounds check, so bad indices are silently clamped to valid rows.
    x_cat_rows = jnp.clip(
        x_cat.astype(jnp.int32) + cat_offsets[None, :].astype(jnp.int32), 0, V - 1)

    # Lane-dense packed Linear(1, D) parameters.
    w_pack = w_num.reshape(1, Fn * D).astype(jnp.float32)
    b_pack = b_num.reshape(1, Fn * D).astype(jnp.float32)

    # Pad the table rows to a multiple of 128 so the one-hot contraction is a
    # clean (TB, 128k) x (128k, D) MXU shape.  Padded rows are never selected.
    V_pad = _round_up(V, 128)
    emb_pad = emb_all.astype(jnp.float32)
    if V_pad != V:
        emb_pad = jnp.pad(emb_pad, ((0, V_pad - V), (0, 0)))

    # ---- VMEM budget & batch-tile selection -----------------------------------
    try:
        vmem_cap = int(getattr(pltpu.get_tpu_info(), "vmem_capacity_bytes",
                               64 * 1024 * 1024))
    except Exception:
        vmem_cap = 64 * 1024 * 1024          # conservative (v7x per-TC VMEM)
    # <= ~48 MiB on v7x (64 MiB physical), up to ~96 MiB on v5e/v6e (128 MiB).
    vmem_limit = int(min(vmem_cap * 3 // 4, 100 * 1024 * 1024))

    resident_bytes = 4 * (w_pack.size + b_pack.size + emb_pad.size + cls_token.size)

    def tile_bytes(t):
        # double-buffered per-tile inputs + output slab
        return 2 * 4 * (t * Fn + t * Fc + t * T * D)

    if tb is None:
        b8 = _round_up(B, 8)
        # Largest power-of-two tile (cap 512), keeping >= 2 grid steps when the
        # batch allows it so both TensorCores get work on v7x megacore.
        cap = min(512, max(8, b8 // 2)) if b8 >= 16 else 8
        tb = 8
        while tb * 2 <= cap:
            tb *= 2
        while tb > 8 and resident_bytes + tile_bytes(tb) > vmem_limit // 2:
            tb //= 2

    B_pad = _round_up(B, tb)
    x_num_p = x_num.astype(jnp.float32)
    if B_pad != B:
        x_num_p = jnp.pad(x_num_p, ((0, B_pad - B), (0, 0)))
        x_cat_rows = jnp.pad(x_cat_rows, ((0, B_pad - B), (0, 0)))

    grid = (B_pad // tb,)
    flops = 2 * B_pad * Fn * D + 2 * B_pad * Fc * V_pad * D
    bytes_accessed = 4 * (x_num_p.size + x_cat_rows.size + w_pack.size + b_pack.size
                          + emb_pad.size + cls_token.size + B_pad * T * D)

    def build_call(single_buffer_resident):
        def resident(shape):
            nd = len(shape)

            def imap(i):
                return (0,) * nd

            if single_buffer_resident:
                # Grid-invariant block: one VMEM copy is enough.
                return pl.BlockSpec(shape, imap, pipeline_mode=pl.Buffered(1))
            return pl.BlockSpec(shape, imap)

        return pl.pallas_call(
            feature_tokenizer_kernel,
            out_shape=jax.ShapeDtypeStruct((B_pad, T * D), jnp.float32),
            grid=grid,
            in_specs=[
                pl.BlockSpec((tb, Fn), lambda i: (i, 0)),        # x_num tile
                pl.BlockSpec((tb, Fc), lambda i: (i, 0)),        # x_cat tile (VMEM i32)
                resident((1, Fn * D)),                           # packed W
                resident((1, Fn * D)),                           # packed b
                resident((V_pad, D)),                            # packed 2-D table
                resident((1, D)),                                # CLS token
            ],
            out_specs=pl.BlockSpec((tb, T * D), lambda i: (i, 0)),
            compiler_params=pltpu.CompilerParams(
                dimension_semantics=("parallel",),
                vmem_limit_bytes=vmem_limit),
            cost_estimate=pl.CostEstimate(
                flops=int(flops), transcendentals=0,
                bytes_accessed=int(bytes_accessed)),
        )

    args = (x_num_p, x_cat_rows, w_pack, b_pack, emb_pad,
            cls_token.astype(jnp.float32))
    try:
        out2 = jax.block_until_ready(build_call(True)(*args))
    except Exception:
        # pl.Buffered / pipeline_mode unsupported on this JAX: default buffering.
        out2 = build_call(False)(*args)

    return out2.reshape(B_pad, T, D)[:B]


def reference(x_num, x_cat, w_num, b_num, emb_all, cat_offsets, cls_token):
    B = x_num.shape[0]
    num_tok = x_num[:, :, None] * w_num[None] + b_num[None]
    rows = x_cat.astype(jnp.int32) + cat_offsets[None, :]
    cat_tok = emb_all[rows]
    cls = jnp.broadcast_to(cls_token[None], (B, 1, cls_token.shape[-1]))
    return jnp.concatenate([cls, num_tok, cat_tok], axis=1)


if __name__ == "__main__":
    B = 2
    num_numerical_features = 3
    cat_cardinalities = [5, 7]
    embed_dim = 32

    Fn = num_numerical_features
    Fc = len(cat_cardinalities)
    V = sum(cat_cardinalities)
    D = embed_dim

    key = jax.random.PRNGKey(0)
    k_wn, k_bn, k_emb, k_cls, k_xn, k_xc = jax.random.split(key, 6)

    # Parameters: per-feature Linear(1, D) packed as rows; tables packed row-wise.
    w_num = jax.random.normal(k_wn, (Fn, D), dtype=jnp.float32) * 0.1
    b_num = jax.random.normal(k_bn, (Fn, D), dtype=jnp.float32) * 0.1
    emb_all = jax.random.normal(k_emb, (V, D), dtype=jnp.float32) * 0.1
    cls_token = jax.random.normal(k_cls, (1, D), dtype=jnp.float32)

    cat_card = jnp.asarray(cat_cardinalities, dtype=jnp.int32)
    cat_offsets = jnp.concatenate(
        [jnp.zeros((1,), jnp.int32), jnp.cumsum(cat_card)[:-1]])

    # Inputs
    x_num = jax.random.normal(k_xn, (B, Fn), dtype=jnp.float32)
    x_cat = jnp.stack(
        [jax.random.randint(jax.random.fold_in(k_xc, j), (B,), 0, cat_cardinalities[j])
         for j in range(Fc)], axis=1).astype(jnp.int32)

    out = feature_tokenizer(x_num, x_cat, w_num, b_num, emb_all, cat_offsets, cls_token)
    out = jax.block_until_ready(out)

    ref = reference(x_num, x_cat, w_num, b_num, emb_all, cat_offsets, cls_token)
    assert out.shape == (B, 1 + Fn + Fc, D), out.shape
    assert jnp.allclose(out, ref, atol=1e-4, rtol=1e-4), "mismatch vs reference"

    print("KERNEL_OK")
</pallas_src>

<mosaic_0001>
module attributes {stable_mosaic.version = 11 : i64} {
  func.func @feature_tokenizer_kernel(%arg0: i32, %arg1: memref<8x3xf32, #tpu.memory_space<vmem>>, %arg2: memref<8x2xi32, #tpu.memory_space<vmem>>, %arg3: memref<1x96xf32, #tpu.memory_space<vmem>>, %arg4: memref<1x96xf32, #tpu.memory_space<vmem>>, %arg5: memref<128x32xf32, #tpu.memory_space<vmem>>, %arg6: memref<1x32xf32, #tpu.memory_space<vmem>>, %arg7: memref<8x192xf32, #tpu.memory_space<vmem>>) attributes {dimension_semantics = [#tpu.dimension_semantics<parallel>], iteration_bounds = array<i64: 1>, scalar_prefetch = 0 : i64, scratch_operands = 0 : i64, tpu.core_type = #tpu.core_type<tc>, window_params = [{transform_indices = @transform_0, window_bounds = array<i64: 8, 3>}, {transform_indices = @transform_1, window_bounds = array<i64: 8, 2>}, {pipeline_mode = #tpu.pipeline_mode<synchronous>, transform_indices = @transform_2, window_bounds = array<i64: 1, 96>}, {pipeline_mode = #tpu.pipeline_mode<synchronous>, transform_indices = @transform_3, window_bounds = array<i64: 1, 96>}, {pipeline_mode = #tpu.pipeline_mode<synchronous>, transform_indices = @transform_4, window_bounds = array<i64: 128, 32>}, {pipeline_mode = #tpu.pipeline_mode<synchronous>, transform_indices = @transform_5, window_bounds = array<i64: 1, 32>}, {transform_indices = @transform_6, window_bounds = array<i64: 8, 192>}]} {
    %c0 = arith.constant 0 : index
    %c0_0 = arith.constant 0 : index
    %0 = vector.load %arg1[%c0, %c0_0] : memref<8x3xf32, #tpu.memory_space<vmem>>, vector<8x3xf32>
    %1 = vector.extract_strided_slice %0 {offsets = [0, 0], sizes = [8, 1], strides = [1, 1]} : vector<8x3xf32> to vector<8x1xf32>
    %2 = vector.shape_cast %1 : vector<8x1xf32> to vector<8x1xf32>
    %3 = vector.broadcast %2 : vector<8x1xf32> to vector<8x32xf32>
    %4 = vector.extract_strided_slice %0 {offsets = [0, 1], sizes = [8, 1], strides = [1, 1]} : vector<8x3xf32> to vector<8x1xf32>
    %5 = vector.shape_cast %4 : vector<8x1xf32> to vector<8x1xf32>
    %6 = vector.broadcast %5 : vector<8x1xf32> to vector<8x32xf32>
    %7 = vector.extract_strided_slice %0 {offsets = [0, 2], sizes = [8, 1], strides = [1, 1]} : vector<8x3xf32> to vector<8x1xf32>
    %8 = vector.shape_cast %7 : vector<8x1xf32> to vector<8x1xf32>
    %9 = vector.broadcast %8 : vector<8x1xf32> to vector<8x32xf32>
    %10 = tpu.concatenate %3, %6, %9 in 1 : vector<8x32xf32>, vector<8x32xf32>, vector<8x32xf32> -> vector<8x96xf32>
    %c0_1 = arith.constant 0 : index
    %c0_2 = arith.constant 0 : index
    %11 = vector.load %arg3[%c0_1, %c0_2] : memref<1x96xf32, #tpu.memory_space<vmem>>, vector<1x96xf32>
    %12 = vector.broadcast %11 : vector<1x96xf32> to vector<8x96xf32>
    %13 = arith.mulf %10, %12 : vector<8x96xf32>
    %c0_3 = arith.constant 0 : index
    %c0_4 = arith.constant 0 : index
    %14 = vector.load %arg4[%c0_3, %c0_4] : memref<1x96xf32, #tpu.memory_space<vmem>>, vector<1x96xf32>
    %15 = vector.broadcast %14 : vector<1x96xf32> to vector<8x96xf32>
    %16 = arith.addf %13, %15 : vector<8x96xf32>
    %c0_5 = arith.constant 0 : index
    %c0_6 = arith.constant 0 : index
    %17 = vector.load %arg6[%c0_5, %c0_6] : memref<1x32xf32, #tpu.memory_space<vmem>>, vector<1x32xf32>
    %18 = vector.shape_cast %17 : vector<1x32xf32> to vector<1x32xf32>
    %19 = vector.broadcast %18 : vector<1x32xf32> to vector<8x32xf32>
    %20 = tpu.concatenate %19, %16 in 1 : vector<8x32xf32>, vector<8x96xf32> -> vector<8x128xf32>
    %c0_7 = arith.constant 0 : index
    %c0_8 = arith.constant 0 : index
    %21 = vector.load %arg7[%c0_7, %c0_8] : memref<8x192xf32, #tpu.memory_space<vmem>>, vector<8x128xf32>
    tpu.vector_store %arg7[%c0_7, %c0_8], %20 {strides = array<i32>} : memref<8x192xf32, #tpu.memory_space<vmem>>, vector<8x128xf32>,
    %c0_9 = arith.constant 0 : index
    %c0_10 = arith.constant 0 : index
    %22 = vector.load %arg5[%c0_9, %c0_10] : memref<128x32xf32, #tpu.memory_space<vmem>>, vector<128x32xf32>
    %c0_11 = arith.constant 0 : index
    %c0_12 = arith.constant 0 : index
    %23 = vector.load %arg2[%c0_11, %c0_12] : memref<8x2xi32, #tpu.memory_space<vmem>>, vector<8x2xi32>
    %24 = tpu.iota {dimensions = array<i32: 1>} : vector<8x128xi32>
    %25 = vector.extract_strided_slice %23 {offsets = [0, 0], sizes = [8, 1], strides = [1, 1]} : vector<8x2xi32> to vector<8x1xi32>
    %26 = vector.broadcast %25 : vector<8x1xi32> to vector<8x128xi32>
    %27 = arith.cmpi eq, %26, %24 : vector<8x128xi32>
    %28 = arith.extui %27 : vector<8x128xi1> to vector<8x128xi32>
    %29 = arith.sitofp %28 : vector<8x128xi32> to vector<8x128xf32>
    %cst = arith.constant dense<0.000000e+00> : vector<8x32xf32>
    %30 = tpu.matmul %29, %22, %cst {dimension_numbers = #tpu.dot_dimension_numbers<[1], [0], [0], [1], [0, 0, 1, 1], [], []>} : vector<8x128xf32>, vector<128x32xf32>, vector<8x32xf32> -> vector<8x32xf32>
    %31 = vector.extract_strided_slice %23 {offsets = [0, 1], sizes = [8, 1], strides = [1, 1]} : vector<8x2xi32> to vector<8x1xi32>
    %32 = vector.broadcast %31 : vector<8x1xi32> to vector<8x128xi32>
    %33 = arith.cmpi eq, %32, %24 : vector<8x128xi32>
    %34 = arith.extui %33 : vector<8x128xi1> to vector<8x128xi32>
    %35 = arith.sitofp %34 : vector<8x128xi32> to vector<8x128xf32>
    %cst_13 = arith.constant dense<0.000000e+00> : vector<8x32xf32>
    %36 = tpu.matmul %35, %22, %cst_13 {dimension_numbers = #tpu.dot_dimension_numbers<[1], [0], [0], [1], [0, 0, 1, 1], [], []>} : vector<8x128xf32>, vector<128x32xf32>, vector<8x32xf32> -> vector<8x32xf32>
    %37 = tpu.concatenate %30, %36 in 1 : vector<8x32xf32>, vector<8x32xf32> -> vector<8x64xf32>
    %c0_14 = arith.constant 0 : index
    %c128 = arith.constant 128 : index
    %38 = vector.load %arg7[%c0_14, %c128] : memref<8x192xf32, #tpu.memory_space<vmem>>, vector<8x64xf32>
    tpu.vector_store %arg7[%c0_14, %c128], %37 {strides = array<i32>} : memref<8x192xf32, #tpu.memory_space<vmem>>, vector<8x64xf32>,
    return
  }
  func.func @transform_0(%arg0: i32) -> (i32, i32) {
    %c0_i32 = arith.constant 0 : i32
    %c0_i32_0 = arith.constant 0 : i32
    return %arg0, %c0_i32 : i32, i32
  }
  func.func @transform_1(%arg0: i32) -> (i32, i32) {
    %c0_i32 = arith.constant 0 : i32
    %c0_i32_0 = arith.constant 0 : i32
    return %arg0, %c0_i32 : i32, i32
  }
  func.func @transform_2(%arg0: i32) -> (i32, i32) {
    %c0_i32 = arith.constant 0 : i32
    %c0_i32_0 = arith.constant 0 : i32
    %c0_i32_1 = arith.constant 0 : i32
    return %c0_i32, %c0_i32_0 : i32, i32
  }
  func.func @transform_3(%arg0: i32) -> (i32, i32) {
    %c0_i32 = arith.constant 0 : i32
    %c0_i32_0 = arith.constant 0 : i32
    %c0_i32_1 = arith.constant 0 : i32
    return %c0_i32, %c0_i32_0 : i32, i32
  }
  func.func @transform_4(%arg0: i32) -> (i32, i32) {
    %c0_i32 = arith.constant 0 : i32
    %c0_i32_0 = arith.constant 0 : i32
    %c0_i32_1 = arith.constant 0 : i32
    return %c0_i32, %c0_i32_0 : i32, i32
  }
  func.func @transform_5(%arg0: i32) -> (i32, i32) {
    %c0_i32 = arith.constant 0 : i32
    %c0_i32_0 = arith.constant 0 : i32
    %c0_i32_1 = arith.constant 0 : i32
    return %c0_i32, %c0_i32_0 : i32, i32
  }
  func.func @transform_6(%arg0: i32) -> (i32, i32) {
    %c0_i32 = arith.constant 0 : i32
    %c0_i32_0 = arith.constant 0 : i32
    return %arg0, %c0_i32 : i32, i32
  }
}

module attributes {stable_mosaic.version = 11 : i64} {
  func.func @feature_tokenizer_kernel(%arg0: i32, %arg1: memref<8x3xf32, #tpu.memory_space<vmem>>, %arg2: memref<8x2xi32, #tpu.memory_space<vmem>>, %arg3: memref<1x96xf32, #tpu.memory_space<vmem>>, %arg4: memref<1x96xf32, #tpu.memory_space<vmem>>, %arg5: memref<128x32xf32, #tpu.memory_space<vmem>>, %arg6: memref<1x32xf32, #tpu.memory_space<vmem>>, %arg7: memref<8x192xf32, #tpu.memory_space<vmem>>) attributes {dimension_semantics = [#tpu.dimension_semantics<parallel>], iteration_bounds = array<i64: 1>, scalar_prefetch = 0 : i64, scratch_operands = 0 : i64, tpu.core_type = #tpu.core_type<tc>, window_params = [{transform_indices = @transform_0, window_bounds = array<i64: 8, 3>}, {transform_indices = @transform_1, window_bounds = array<i64: 8, 2>}, {pipeline_mode = #tpu.pipeline_mode<synchronous>, transform_indices = @transform_2, window_bounds = array<i64: 1, 96>}, {pipeline_mode = #tpu.pipeline_mode<synchronous>, transform_indices = @transform_3, window_bounds = array<i64: 1, 96>}, {pipeline_mode = #tpu.pipeline_mode<synchronous>, transform_indices = @transform_4, window_bounds = array<i64: 128, 32>}, {pipeline_mode = #tpu.pipeline_mode<synchronous>, transform_indices = @transform_5, window_bounds = array<i64: 1, 32>}, {transform_indices = @transform_6, window_bounds = array<i64: 8, 192>}]} {
    %c0 = arith.constant 0 : index
    %c0_0 = arith.constant 0 : index
    %0 = vector.load %arg1[%c0, %c0_0] : memref<8x3xf32, #tpu.memory_space<vmem>>, vector<8x3xf32>
    %1 = vector.extract_strided_slice %0 {offsets = [0, 0], sizes = [8, 1], strides = [1, 1]} : vector<8x3xf32> to vector<8x1xf32>
    %2 = vector.shape_cast %1 : vector<8x1xf32> to vector<8x1xf32>
    %3 = vector.broadcast %2 : vector<8x1xf32> to vector<8x32xf32>
    %4 = vector.extract_strided_slice %0 {offsets = [0, 1], sizes = [8, 1], strides = [1, 1]} : vector<8x3xf32> to vector<8x1xf32>
    %5 = vector.shape_cast %4 : vector<8x1xf32> to vector<8x1xf32>
    %6 = vector.broadcast %5 : vector<8x1xf32> to vector<8x32xf32>
    %7 = vector.extract_strided_slice %0 {offsets = [0, 2], sizes = [8, 1], strides = [1, 1]} : vector<8x3xf32> to vector<8x1xf32>
    %8 = vector.shape_cast %7 : vector<8x1xf32> to vector<8x1xf32>
    %9 = vector.broadcast %8 : vector<8x1xf32> to vector<8x32xf32>
    %10 = tpu.concatenate %3, %6, %9 in 1 : vector<8x32xf32>, vector<8x32xf32>, vector<8x32xf32> -> vector<8x96xf32>
    %c0_1 = arith.constant 0 : index
    %c0_2 = arith.constant 0 : index
    %11 = vector.load %arg3[%c0_1, %c0_2] : memref<1x96xf32, #tpu.memory_space<vmem>>, vector<1x96xf32>
    %12 = vector.broadcast %11 : vector<1x96xf32> to vector<8x96xf32>
    %13 = arith.mulf %10, %12 : vector<8x96xf32>
    %c0_3 = arith.constant 0 : index
    %c0_4 = arith.constant 0 : index
    %14 = vector.load %arg4[%c0_3, %c0_4] : memref<1x96xf32, #tpu.memory_space<vmem>>, vector<1x96xf32>
    %15 = vector.broadcast %14 : vector<1x96xf32> to vector<8x96xf32>
    %16 = arith.addf %13, %15 : vector<8x96xf32>
    %c0_5 = arith.constant 0 : index
    %c0_6 = arith.constant 0 : index
    %17 = vector.load %arg6[%c0_5, %c0_6] : memref<1x32xf32, #tpu.memory_space<vmem>>, vector<1x32xf32>
    %18 = vector.shape_cast %17 : vector<1x32xf32> to vector<1x32xf32>
    %19 = vector.broadcast %18 : vector<1x32xf32> to vector<8x32xf32>
    %20 = tpu.concatenate %19, %16 in 1 : vector<8x32xf32>, vector<8x96xf32> -> vector<8x128xf32>
    %c0_7 = arith.constant 0 : index
    %c0_8 = arith.constant 0 : index
    %21 = vector.load %arg7[%c0_7, %c0_8] : memref<8x192xf32, #tpu.memory_space<vmem>>, vector<8x128xf32>
    tpu.vector_store %arg7[%c0_7, %c0_8], %20 {strides = array<i32>} : memref<8x192xf32, #tpu.memory_space<vmem>>, vector<8x128xf32>,
    %c0_9 = arith.constant 0 : index
    %c0_10 = arith.constant 0 : index
    %22 = vector.load %arg5[%c0_9, %c0_10] : memref<128x32xf32, #tpu.memory_space<vmem>>, vector<128x32xf32>
    %c0_11 = arith.constant 0 : index
    %c0_12 = arith.constant 0 : index
    %23 = vector.load %arg2[%c0_11, %c0_12] : memref<8x2xi32, #tpu.memory_space<vmem>>, vector<8x2xi32>
    %24 = tpu.iota {dimensions = array<i32: 1>} : vector<8x128xi32>
    %25 = vector.extract_strided_slice %23 {offsets = [0, 0], sizes = [8, 1], strides = [1, 1]} : vector<8x2xi32> to vector<8x1xi32>
    %26 = vector.broadcast %25 : vector<8x1xi32> to vector<8x128xi32>
    %27 = arith.cmpi eq, %26, %24 : vector<8x128xi32>
    %28 = arith.extui %27 : vector<8x128xi1> to vector<8x128xi32>
    %29 = arith.sitofp %28 : vector<8x128xi32> to vector<8x128xf32>
    %cst = arith.constant dense<0.000000e+00> : vector<8x32xf32>
    %30 = tpu.matmul %29, %22, %cst {dimension_numbers = #tpu.dot_dimension_numbers<[1], [0], [0], [1], [0, 0, 1, 1], [], []>} : vector<8x128xf32>, vector<128x32xf32>, vector<8x32xf32> -> vector<8x32xf32>
    %31 = vector.extract_strided_slice %23 {offsets = [0, 1], sizes = [8, 1], strides = [1, 1]} : vector<8x2xi32> to vector<8x1xi32>
    %32 = vector.broadcast %31 : vector<8x1xi32> to vector<8x128xi32>
    %33 = arith.cmpi eq, %32, %24 : vector<8x128xi32>
    %34 = arith.extui %33 : vector<8x128xi1> to vector<8x128xi32>
    %35 = arith.sitofp %34 : vector<8x128xi32> to vector<8x128xf32>
    %cst_13 = arith.constant dense<0.000000e+00> : vector<8x32xf32>
    %36 = tpu.matmul %35, %22, %cst_13 {dimension_numbers = #tpu.dot_dimension_numbers<[1], [0], [0], [1], [0, 0, 1, 1], [], []>} : vector<8x128xf32>, vector<128x32xf32>, vector<8x32xf32> -> vector<8x32xf32>
    %37 = tpu.concatenate %30, %36 in 1 : vector<8x32xf32>, vector<8x32xf32> -> vector<8x64xf32>
    %c0_14 = arith.constant 0 : index
    %c128 = arith.constant 128 : index
    %38 = vector.load %arg7[%c0_14, %c128] : memref<8x192xf32, #tpu.memory_space<vmem>>, vector<8x64xf32>
    tpu.vector_store %arg7[%c0_14, %c128], %37 {strides = array<i32>} : memref<8x192xf32, #tpu.memory_space<vmem>>, vector<8x64xf32>,
    return
  }
  func.func @transform_0(%arg0: i32) -> (i32, i32) {
    %c0_i32 = arith.constant 0 : i32
    %c0_i32_0 = arith.constant 0 : i32
    return %arg0, %c0_i32 : i32, i32
  }
  func.func @transform_1(%arg0: i32) -> (i32, i32) {
    %c0_i32 = arith.constant 0 : i32
    %c0_i32_0 = arith.constant 0 : i32
    return %arg0, %c0_i32 : i32, i32
  }
  func.func @transform_2(%arg0: i32) -> (i32, i32) {
    %c0_i32 = arith.constant 0 : i32
    %c0_i32_0 = arith.constant 0 : i32
    %c0_i32_1 = arith.constant 0 : i32
    return %c0_i32, %c0_i32_0 : i32, i32
  }
  func.func @transform_3(%arg0: i32) -> (i32, i32) {
    %c0_i32 = arith.constant 0 : i32
    %c0_i32_0 = arith.constant 0 : i32
    %c0_i32_1 = arith.constant 0 : i32
    return %c0_i32, %c0_i32_0 : i32, i32
  }
  func.func @transform_4(%arg0: i32) -> (i32, i32) {
    %c0_i32 = arith.constant 0 : i32
    %c0_i32_0 = arith.constant 0 : i32
    %c0_i32_1 = arith.constant 0 : i32
    return %c0_i32, %c0_i32_0 : i32, i32
  }
  func.func @transform_5(%arg0: i32) -> (i32, i32) {
    %c0_i32 = arith.constant 0 : i32
    %c0_i32_0 = arith.constant 0 : i32
    %c0_i32_1 = arith.constant 0 : i32
    return %c0_i32, %c0_i32_0 : i32, i32
  }
  func.func @transform_6(%arg0: i32) -> (i32, i32) {
    %c0_i32 = arith.constant 0 : i32
    %c0_i32_0 = arith.constant 0 : i32
    return %arg0, %c0_i32 : i32, i32
  }
}

</mosaic_0001>

<llo_original>
// kernel: tpu_custom_call.1
$region0: #{tpu_custom_call.1}
  #allocation0 [shape = 'u32[]', space=smem, size = 0x4, offset = 0x4, fixed_abs, tag = 'smem constant byte address 0x4 - core index']
  #allocation1 [shape = 'u32[144,128]{1,0:T(1,128)}', space=vmem, size = 0x12000, scoped, tag = 'internal scratch']
  %s0 = inlined_call_operand.vmem [shape: f32[8,3], index: 0, kind: input, shape index: {}]
  %s1 = inlined_call_operand.vmem [shape: s32[8,2], index: 1, kind: input, shape index: {}]
  %s2 = inlined_call_operand.vmem [shape: f32[1,96], index: 2, kind: input, shape index: {}]
  %s3 = inlined_call_operand.vmem [shape: f32[1,96], index: 3, kind: input, shape index: {}]
  %s4 = inlined_call_operand.vmem [shape: f32[128,32], index: 4, kind: input, shape index: {}]
  %s5 = inlined_call_operand.vmem [shape: f32[1,32], index: 5, kind: input, shape index: {}]
  %s6 = inlined_call_operand.hbm [shape: f32[8,192], index: 6, kind: output, shape index: {}]
  %s7 = sld [smem:[#allocation0]]
  $region34: #{tpu_custom_call.1} parent=0
    _
  %s9 = ssub.s32 1, %s7
  %s10 = scalar_select 0, %s9, %s7
  $region1: #{tpu_custom_call.1} parent=0
    #allocation2 [shape = 'u8[8192]{0}', space=vmem, size = 0x2000, scoped, tag = 'output window, operand 0, single buffered']
    #allocation3 [shape = 's32[1]{0}', space=sflag, size = 0x4, scoped, tag = 'scoped memory for tpu_custom_call.1']
    %11 = vsyncpa [#allocation3], 0
    // Predicated region
    $region2: #{tpu_custom_call.1} parent=1 // pred_check
      _
    $region3: #{tpu_custom_call.1} parent=1 // pred_check_branch
      %13 = sbr.rel (0) target = $region5
    $region4: #{tpu_custom_call.1} parent=1 // pred_region
      _
    $region5: #{tpu_custom_call.1} parent=1 // pred_fallthru
      _
    // Predicated region
    $region6: #{tpu_custom_call.1} parent=1 // pred_check
      _
    $region7: #{tpu_custom_call.1} parent=1 // pred_check_branch
      %15 = sbr.rel (0) target = $region9
    $region8: #{tpu_custom_call.1} parent=1 // pred_region
      _
    $region9: #{tpu_custom_call.1} parent=1 // pred_fallthru
      _
    // Predicated region
    $region10: #{tpu_custom_call.1} parent=1 // pred_check
      _
    $region11: #{tpu_custom_call.1} parent=1 // pred_check_branch
      %17 = sbr.rel (0) target = $region13
    $region12: #{tpu_custom_call.1} parent=1 // pred_region
      _
    $region13: #{tpu_custom_call.1} parent=1 // pred_fallthru
      _
    // Predicated region
    $region14: #{tpu_custom_call.1} parent=1 // pred_check
      _
    $region15: #{tpu_custom_call.1} parent=1 // pred_check_branch
      %19 = sbr.rel (0) target = $region17
    $region16: #{tpu_custom_call.1} parent=1 // pred_region
      _
    $region17: #{tpu_custom_call.1} parent=1 // pred_fallthru
      _
    // Predicated region
    $region18: #{tpu_custom_call.1} parent=1 // pred_check
      _
    $region19: #{tpu_custom_call.1} parent=1 // pred_check_branch
      %21 = sbr.rel (0) target = $region21
    $region20: #{tpu_custom_call.1} parent=1 // pred_region
      _
    $region21: #{tpu_custom_call.1} parent=1 // pred_fallthru
      _
    // Predicated region
    $region22: #{tpu_custom_call.1} parent=1 // pred_check
      _
    $region23: #{tpu_custom_call.1} parent=1 // pred_check_branch
      %23 = sbr.rel (0) target = $region25
    $region24: #{tpu_custom_call.1} parent=1 // pred_region
      _
    $region25: #{tpu_custom_call.1} parent=1 // pred_fallthru
      _
    %v24 = vld [vmem:[%s0] sm:$0xff]
    %26 = vset.pattern.permute.xlu0 0
    %27 = vperm.xlu0 %26, %v24
    %v28 = vpop.permute.xlu0 %27
    %30 = vset.pattern.permute.xlu0 1
    %31 = vperm.xlu0 %30, %v24
    %v32 = vpop.permute.xlu0 %31
    %34 = vset.pattern.permute.xlu0 2
    %35 = vperm.xlu0 %34, %v24
    %v36 = vpop.permute.xlu0 %35
    %vm38 = vcmask 261120
    %v39 = vsel %vm38, %v28, %v32
    %vm40 = vcmask 523264
    %v41 = vsel %vm40, %v39, %v36
    %v42 = vld [vmem:[%s2] sm:$0x1]
    %v44 = vlaneseq
    %v45 = vshrl.u32 %v44, 7
    %v46 = vsub.s32 0, %v45
    %v47 = vrot.slane %v42, %v46
    %v49 = vmul.f32 %v41, %v47
    %v50 = vld [vmem:[%s3] sm:$0x1]
    %v52 = vlaneseq
    %v53 = vshrl.u32 %v52, 7
    %v54 = vsub.s32 0, %v53
    %v55 = vrot.slane %v50, %v54
    %v57 = vadd.f32 %v49, %v55
    %v58 = vld [vmem:[%s5] sm:$0x1]
    %v60 = vlaneseq
    %v61 = vshrl.u32 %v60, 7
    %v62 = vsub.s32 0, %v61
    %v63 = vrot.slane %v58, %v62
    %66 = vrot.lane.b32.xlu0 %v57, 32
    %v67 = vpop.permute.xlu0 %66
    %v69 = vsel %vm38, %v63, %v67
    %70 = vst [vmem:[#allocation2] sm:$0xff] %v69
    %v71 = vld [vmem:[%s4] sm:$0xff]
    %v72 = vld [vmem:[%s4 + $0x8] sm:$0xff]
    %v73 = vld [vmem:[%s4 + $0x10] sm:$0xff]
    %v74 = vld [vmem:[%s4 + $0x18] sm:$0xff]
    %v75 = vld [vmem:[%s4 + $0x20] sm:$0xff]
    %v76 = vld [vmem:[%s4 + $0x28] sm:$0xff]
    %v77 = vld [vmem:[%s4 + $0x30] sm:$0xff]
    %v78 = vld [vmem:[%s4 + $0x38] sm:$0xff]
    %v79 = vld [vmem:[%s4 + $0x40] sm:$0xff]
    %v80 = vld [vmem:[%s4 + $0x48] sm:$0xff]
    %v81 = vld [vmem:[%s4 + $0x50] sm:$0xff]
    %v82 = vld [vmem:[%s4 + $0x58] sm:$0xff]
    %v83 = vld [vmem:[%s4 + $0x60] sm:$0xff]
    %v84 = vld [vmem:[%s4 + $0x68] sm:$0xff]
    %v85 = vld [vmem:[%s4 + $0x70] sm:$0xff]
    %v86 = vld [vmem:[%s4 + $0x78] sm:$0xff]
    %v87 = vld [vmem:[%s1] sm:$0xff]
    %v88 = vlaneseq
    %v89 = vand.u32 %v88, 127
    %90 = vset.pattern.permute.xlu0 0
    %91 = vperm.xlu0 %90, %v87
    %v92 = vpop.permute.xlu0 %91
    %vm93 = vcmp.eq.s32.totalorder %v92, %v89
    %v94 = vsel %vm93, 1, 0
    %v95 = vcvt.s32.f32 %v94
    %96 = vmatprep.subr.mxu0 0.0
    %97 = vmatpush1.msra.mxu0 %v86
    %98 = vmatprep.subr.mxu0 0.0
    %99 = vmatpush1.msra.mxu0 %v85
    %100 = vmatprep.subr.mxu0 0.0
    %101 = vmatpush1.msra.mxu0 %v84
    %102 = vmatprep.subr.mxu0 0.0
    %103 = vmatpush1.msra.mxu0 %v83
    %104 = vmatprep.subr.mxu0 0.0
    %105 = vmatpush1.msra.mxu0 %v82
    %106 = vmatprep.subr.mxu0 0.0
    %107 = vmatpush1.msra.mxu0 %v81
    %108 = vmatprep.subr.mxu0 0.0
    %109 = vmatpush1.msra.mxu0 %v80
    %110 = vmatprep.subr.mxu0 0.0
    %111 = vmatpush1.msra.mxu0 %v79
    %112 = vmatprep.subr.mxu0 0.0
    %113 = vmatpush1.msra.mxu0 %v78
    %114 = vmatprep.subr.mxu0 0.0
    %115 = vmatpush1.msra.mxu0 %v77
    %116 = vmatprep.subr.mxu0 0.0
    %117 = vmatpush1.msra.mxu0 %v76
    %118 = vmatprep.subr.mxu0 0.0
    %119 = vmatpush1.msra.mxu0 %v75
    %120 = vmatprep.subr.mxu0 0.0
    %121 = vmatpush1.msra.mxu0 %v74
    %122 = vmatprep.subr.mxu0 0.0
    %123 = vmatpush1.msra.mxu0 %v73
    %124 = vmatprep.subr.mxu0 0.0
    %125 = vmatpush1.msra.mxu0 %v72
    %126 = vmatprep.subr.mxu0 0.0
    %127 = vmatpush1.msra.mxu0 %v71
    %128 = vmatprep.subr.mxu0 0.0
    %129 = vmatpush2.msra.mxu0 0.0
    %130 = vmatprep.subr.mxu0 0.0
    %131 = vmatpush2.msra.mxu0 0.0
    %132 = vmatprep.subr.mxu0 0.0
    %133 = vmatpush2.msra.mxu0 0.0
    %134 = vmatprep.subr.mxu0 0.0
    %135 = vmatpush2.msra.mxu0 0.0
    %136 = vmatprep.subr.mxu0 0.0
    %137 = vmatpush2.msra.mxu0 0.0
    %138 = vmatprep.subr.mxu0 0.0
    %139 = vmatpush2.msra.mxu0 0.0
    %140 = vmatprep.subr.mxu0 0.0
    %141 = vmatpush2.msra.mxu0 0.0
    %142 = vmatprep.subr.mxu0 0.0
    %143 = vmatpush2.msra.mxu0 0.0
    %144 = vmatprep.subr.mxu0 0.0
    %145 = vmatpush2.msra.mxu0 0.0
    %146 = vmatprep.subr.mxu0 0.0
    %147 = vmatpush2.msra.mxu0 0.0
    %148 = vmatprep.subr.mxu0 0.0
    %149 = vmatpush2.msra.mxu0 0.0
    %150 = vmatprep.subr.mxu0 0.0
    %151 = vmatpush2.msra.mxu0 0.0
    %152 = vmatprep.subr.mxu0 0.0
    %153 = vmatpush2.msra.mxu0 0.0
    %154 = vmatprep.subr.mxu0 0.0
    %155 = vmatpush2.msra.mxu0 0.0
    %156 = vmatprep.subr.mxu0 0.0
    %157 = vmatpush2.msra.mxu0 0.0
    %158 = vmatprep.subr.mxu0 0.0
    %159 = vmatpush2.msra.mxu0 0.0
    %160 = vmatprep.mubr.f32.mxu0 0.0
    %161 = vmatmul.mubr.f32.gmra.mxu0 %v95
    %v162 = vpop.f32.mrf.mxu0
    %v163 = vadd.f32 0.0, %v162
    %v164 = vpop.f32.mrf.mxu0
    %165 = vdwg.mxu0
    %166 = vset.pattern.permute.xlu0 1
    %167 = vperm.xlu0 %166, %v87
    %v168 = vpop.permute.xlu0 %167
    %vm169 = vcmp.eq.s32.totalorder %v168, %v89
    %v170 = vsel %vm169, 1, 0
    %v171 = vcvt.s32.f32 %v170
    %172 = vmatprep.subr.mxu0 0.0
    %173 = vmatpush1.msra.mxu0 %v86
    %174 = vmatprep.subr.mxu0 0.0
    %175 = vmatpush1.msra.mxu0 %v85
    %176 = vmatprep.subr.mxu0 0.0
    %177 = vmatpush1.msra.mxu0 %v84
    %178 = vmatprep.subr.mxu0 0.0
    %179 = vmatpush1.msra.mxu0 %v83
    %180 = vmatprep.subr.mxu0 0.0
    %181 = vmatpush1.msra.mxu0 %v82
    %182 = vmatprep.subr.mxu0 0.0
    %183 = vmatpush1.msra.mxu0 %v81
    %184 = vmatprep.subr.mxu0 0.0
    %185 = vmatpush1.msra.mxu0 %v80
    %186 = vmatprep.subr.mxu0 0.0
    %187 = vmatpush1.msra.mxu0 %v79
    %188 = vmatprep.subr.mxu0 0.0
    %189 = vmatpush1.msra.mxu0 %v78
    %190 = vmatprep.subr.mxu0 0.0
    %191 = vmatpush1.msra.mxu0 %v77
    %192 = vmatprep.subr.mxu0 0.0
    %193 = vmatpush1.msra.mxu0 %v76
    %194 = vmatprep.subr.mxu0 0.0
    %195 = vmatpush1.msra.mxu0 %v75
    %196 = vmatprep.subr.mxu0 0.0
    %197 = vmatpush1.msra.mxu0 %v74
    %198 = vmatprep.subr.mxu0 0.0
    %199 = vmatpush1.msra.mxu0 %v73
    %200 = vmatprep.subr.mxu0 0.0
    %201 = vmatpush1.msra.mxu0 %v72
    %202 = vmatprep.subr.mxu0 0.0
    %203 = vmatpush1.msra.mxu0 %v71
    %204 = vmatprep.subr.mxu0 0.0
    %205 = vmatpush2.msra.mxu0 0.0
    %206 = vmatprep.subr.mxu0 0.0
    %207 = vmatpush2.msra.mxu0 0.0
    %208 = vmatprep.subr.mxu0 0.0
    %209 = vmatpush2.msra.mxu0 0.0
    %210 = vmatprep.subr.mxu0 0.0
    %211 = vmatpush2.msra.mxu0 0.0
    %212 = vmatprep.subr.mxu0 0.0
    %213 = vmatpush2.msra.mxu0 0.0
    %214 = vmatprep.subr.mxu0 0.0
    %215 = vmatpush2.msra.mxu0 0.0
    %216 = vmatprep.subr.mxu0 0.0
    %217 = vmatpush2.msra.mxu0 0.0
    %218 = vmatprep.subr.mxu0 0.0
    %219 = vmatpush2.msra.mxu0 0.0
    %220 = vmatprep.subr.mxu0 0.0
    %221 = vmatpush2.msra.mxu0 0.0
    %222 = vmatprep.subr.mxu0 0.0
    %223 = vmatpush2.msra.mxu0 0.0
    %224 = vmatprep.subr.mxu0 0.0
    %225 = vmatpush2.msra.mxu0 0.0
    %226 = vmatprep.subr.mxu0 0.0
    %227 = vmatpush2.msra.mxu0 0.0
    %228 = vmatprep.subr.mxu0 0.0
    %229 = vmatpush2.msra.mxu0 0.0
    %230 = vmatprep.subr.mxu0 0.0
    %231 = vmatpush2.msra.mxu0 0.0
    %232 = vmatprep.subr.mxu0 0.0
    %233 = vmatpush2.msra.mxu0 0.0
    %234 = vmatprep.subr.mxu0 0.0
    %235 = vmatpush2.msra.mxu0 0.0
    %236 = vmatprep.mubr.f32.mxu0 0.0
    %237 = vmatmul.mubr.f32.gmra.mxu0 %v171
    %v238 = vpop.f32.mrf.mxu0
    %v239 = vadd.f32 0.0, %v238
    %v240 = vpop.f32.mrf.mxu0
    %241 = vdwg.mxu0
    %243 = vrot.lane.b32.xlu0 %v239, 32
    %v244 = vpop.permute.xlu0 %243
    %v246 = vsel %vm38, %v163, %v244
    %247 = vst.msk [vmem:[#allocation2 + $0x8] sm:$0xff] %vm40, %v246
    // Predicated region
    $region26: #{tpu_custom_call.1} parent=1 // pred_check
      _
    $region27: #{tpu_custom_call.1} parent=1 // pred_check_branch
      %249 = sbr.rel (0) target = $region29
    $region28: #{tpu_custom_call.1} parent=1 // pred_region
      %s251 = ssub.s32 256, 256
      %252 = vsyncadd [#allocation3], %s251
      %s254 = sshll.u32 [#allocation2], 4
      %s255 = int_to_ptr.vmem [resolvable:$true] %s254
      %257 = dma.vmem_to_hbm [thread:$0]  %s255, 256, %s6, [#allocation3]
    $region29: #{tpu_custom_call.1} parent=1 // pred_fallthru
      _
    // Predicated region
    $region30: #{tpu_custom_call.1} parent=1 // pred_check
      _
    $region31: #{tpu_custom_call.1} parent=1 // pred_check_branch
      %259 = sbr.rel (0) target = $region33
    $region32: #{tpu_custom_call.1} parent=1 // pred_region
      %260 = dma.done [#allocation3], 256
    $region33: #{tpu_custom_call.1} parent=1 // pred_fallthru
      _
    %261 = vsyncpa [#allocation3], 1

// kernel: tpu_custom_call.1
$region0: #{tpu_custom_call.1}
  #allocation0 [shape = 'u32[]', space=smem, size = 0x4, offset = 0x4, fixed_abs, tag = 'smem constant byte address 0x4 - core index']
  #allocation1 [shape = 'u32[144,128]{1,0:T(1,128)}', space=vmem, size = 0x12000, scoped, tag = 'internal scratch']
  %s0 = inlined_call_operand.vmem [shape: f32[8,3], index: 0, kind: input, shape index: {}]
  %s1 = inlined_call_operand.vmem [shape: s32[8,2], index: 1, kind: input, shape index: {}]
  %s2 = inlined_call_operand.vmem [shape: f32[1,96], index: 2, kind: input, shape index: {}]
  %s3 = inlined_call_operand.vmem [shape: f32[1,96], index: 3, kind: input, shape index: {}]
  %s4 = inlined_call_operand.vmem [shape: f32[128,32], index: 4, kind: input, shape index: {}]
  %s5 = inlined_call_operand.vmem [shape: f32[1,32], index: 5, kind: input, shape index: {}]
  %s6 = inlined_call_operand.hbm [shape: f32[8,192], index: 6, kind: output, shape index: {}]
  %s7 = sld [smem:[#allocation0]]
  $region34: #{tpu_custom_call.1} parent=0
    _
  %s9 = ssub.s32 1, %s7
  %s10 = scalar_select 0, %s9, %s7
  $region1: #{tpu_custom_call.1} parent=0
    #allocation2 [shape = 'u8[8192]{0}', space=vmem, size = 0x2000, scoped, tag = 'output window, operand 0, single buffered']
    #allocation3 [shape = 's32[1]{0}', space=sflag, size = 0x4, scoped, tag = 'scoped memory for tpu_custom_call.1']
    %11 = vsyncpa [#allocation3], 0
    // Predicated region
    $region2: #{tpu_custom_call.1} parent=1 // pred_check
      _
    $region3: #{tpu_custom_call.1} parent=1 // pred_check_branch
      %13 = sbr.rel (0) target = $region5
    $region4: #{tpu_custom_call.1} parent=1 // pred_region
      _
    $region5: #{tpu_custom_call.1} parent=1 // pred_fallthru
      _
    // Predicated region
    $region6: #{tpu_custom_call.1} parent=1 // pred_check
      _
    $region7: #{tpu_custom_call.1} parent=1 // pred_check_branch
      %15 = sbr.rel (0) target = $region9
    $region8: #{tpu_custom_call.1} parent=1 // pred_region
      _
    $region9: #{tpu_custom_call.1} parent=1 // pred_fallthru
      _
    // Predicated region
    $region10: #{tpu_custom_call.1} parent=1 // pred_check
      _
    $region11: #{tpu_custom_call.1} parent=1 // pred_check_branch
      %17 = sbr.rel (0) target = $region13
    $region12: #{tpu_custom_call.1} parent=1 // pred_region
      _
    $region13: #{tpu_custom_call.1} parent=1 // pred_fallthru
      _
    // Predicated region
    $region14: #{tpu_custom_call.1} parent=1 // pred_check
      _
    $region15: #{tpu_custom_call.1} parent=1 // pred_check_branch
      %19 = sbr.rel (0) target = $region17
    $region16: #{tpu_custom_call.1} parent=1 // pred_region
      _
    $region17: #{tpu_custom_call.1} parent=1 // pred_fallthru
      _
    // Predicated region
    $region18: #{tpu_custom_call.1} parent=1 // pred_check
      _
    $region19: #{tpu_custom_call.1} parent=1 // pred_check_branch
      %21 = sbr.rel (0) target = $region21
    $region20: #{tpu_custom_call.1} parent=1 // pred_region
      _
    $region21: #{tpu_custom_call.1} parent=1 // pred_fallthru
      _
    // Predicated region
    $region22: #{tpu_custom_call.1} parent=1 // pred_check
      _
    $region23: #{tpu_custom_call.1} parent=1 // pred_check_branch
      %23 = sbr.rel (0) target = $region25
    $region24: #{tpu_custom_call.1} parent=1 // pred_region
      _
    $region25: #{tpu_custom_call.1} parent=1 // pred_fallthru
      _
    %v24 = vld [vmem:[%s0] sm:$0xff]
    %26 = vset.pattern.permute.xlu0 0
    %27 = vperm.xlu0 %26, %v24
    %v28 = vpop.permute.xlu0 %27
    %30 = vset.pattern.permute.xlu0 1
    %31 = vperm.xlu0 %30, %v24
    %v32 = vpop.permute.xlu0 %31
    %34 = vset.pattern.permute.xlu0 2
    %35 = vperm.xlu0 %34, %v24
    %v36 = vpop.permute.xlu0 %35
    %vm38 = vcmask 261120
    %v39 = vsel %vm38, %v28, %v32
    %vm40 = vcmask 523264
    %v41 = vsel %vm40, %v39, %v36
    %v42 = vld [vmem:[%s2] sm:$0x1]
    %v44 = vlaneseq
    %v45 = vshrl.u32 %v44, 7
    %v46 = vsub.s32 0, %v45
    %v47 = vrot.slane %v42, %v46
    %v49 = vmul.f32 %v41, %v47
    %v50 = vld [vmem:[%s3] sm:$0x1]
    %v52 = vlaneseq
    %v53 = vshrl.u32 %v52, 7
    %v54 = vsub.s32 0, %v53
    %v55 = vrot.slane %v50, %v54
    %v57 = vadd.f32 %v49, %v55
    %v58 = vld [vmem:[%s5] sm:$0x1]
    %v60 = vlaneseq
    %v61 = vshrl.u32 %v60, 7
    %v62 = vsub.s32 0, %v61
    %v63 = vrot.slane %v58, %v62
    %66 = vrot.lane.b32.xlu0 %v57, 32
    %v67 = vpop.permute.xlu0 %66
    %v69 = vsel %vm38, %v63, %v67
    %70 = vst [vmem:[#allocation2] sm:$0xff] %v69
    %v71 = vld [vmem:[%s4] sm:$0xff]
    %v72 = vld [vmem:[%s4 + $0x8] sm:$0xff]
    %v73 = vld [vmem:[%s4 + $0x10] sm:$0xff]
    %v74 = vld [vmem:[%s4 + $0x18] sm:$0xff]
    %v75 = vld [vmem:[%s4 + $0x20] sm:$0xff]
    %v76 = vld [vmem:[%s4 + $0x28] sm:$0xff]
    %v77 = vld [vmem:[%s4 + $0x30] sm:$0xff]
    %v78 = vld [vmem:[%s4 + $0x38] sm:$0xff]
    %v79 = vld [vmem:[%s4 + $0x40] sm:$0xff]
    %v80 = vld [vmem:[%s4 + $0x48] sm:$0xff]
    %v81 = vld [vmem:[%s4 + $0x50] sm:$0xff]
    %v82 = vld [vmem:[%s4 + $0x58] sm:$0xff]
    %v83 = vld [vmem:[%s4 + $0x60] sm:$0xff]
    %v84 = vld [vmem:[%s4 + $0x68] sm:$0xff]
    %v85 = vld [vmem:[%s4 + $0x70] sm:$0xff]
    %v86 = vld [vmem:[%s4 + $0x78] sm:$0xff]
    %v87 = vld [vmem:[%s1] sm:$0xff]
    %v88 = vlaneseq
    %v89 = vand.u32 %v88, 127
    %90 = vset.pattern.permute.xlu0 0
    %91 = vperm.xlu0 %90, %v87
    %v92 = vpop.permute.xlu0 %91
    %vm93 = vcmp.eq.s32.totalorder %v92, %v89
    %v94 = vsel %vm93, 1, 0
    %v95 = vcvt.s32.f32 %v94
    %96 = vmatprep.subr.mxu0 0.0
    %97 = vmatpush1.msra.mxu0 %v86
    %98 = vmatprep.subr.mxu0 0.0
    %99 = vmatpush1.msra.mxu0 %v85
    %100 = vmatprep.subr.mxu0 0.0
    %101 = vmatpush1.msra.mxu0 %v84
    %102 = vmatprep.subr.mxu0 0.0
    %103 = vmatpush1.msra.mxu0 %v83
    %104 = vmatprep.subr.mxu0 0.0
    %105 = vmatpush1.msra.mxu0 %v82
    %106 = vmatprep.subr.mxu0 0.0
    %107 = vmatpush1.msra.mxu0 %v81
    %108 = vmatprep.subr.mxu0 0.0
    %109 = vmatpush1.msra.mxu0 %v80
    %110 = vmatprep.subr.mxu0 0.0
    %111 = vmatpush1.msra.mxu0 %v79
    %112 = vmatprep.subr.mxu0 0.0
    %113 = vmatpush1.msra.mxu0 %v78
    %114 = vmatprep.subr.mxu0 0.0
    %115 = vmatpush1.msra.mxu0 %v77
    %116 = vmatprep.subr.mxu0 0.0
    %117 = vmatpush1.msra.mxu0 %v76
    %118 = vmatprep.subr.mxu0 0.0
    %119 = vmatpush1.msra.mxu0 %v75
    %120 = vmatprep.subr.mxu0 0.0
    %121 = vmatpush1.msra.mxu0 %v74
    %122 = vmatprep.subr.mxu0 0.0
    %123 = vmatpush1.msra.mxu0 %v73
    %124 = vmatprep.subr.mxu0 0.0
    %125 = vmatpush1.msra.mxu0 %v72
    %126 = vmatprep.subr.mxu0 0.0
    %127 = vmatpush1.msra.mxu0 %v71
    %128 = vmatprep.subr.mxu0 0.0
    %129 = vmatpush2.msra.mxu0 0.0
    %130 = vmatprep.subr.mxu0 0.0
    %131 = vmatpush2.msra.mxu0 0.0
    %132 = vmatprep.subr.mxu0 0.0
    %133 = vmatpush2.msra.mxu0 0.0
    %134 = vmatprep.subr.mxu0 0.0
    %135 = vmatpush2.msra.mxu0 0.0
    %136 = vmatprep.subr.mxu0 0.0
    %137 = vmatpush2.msra.mxu0 0.0
    %138 = vmatprep.subr.mxu0 0.0
    %139 = vmatpush2.msra.mxu0 0.0
    %140 = vmatprep.subr.mxu0 0.0
    %141 = vmatpush2.msra.mxu0 0.0
    %142 = vmatprep.subr.mxu0 0.0
    %143 = vmatpush2.msra.mxu0 0.0
    %144 = vmatprep.subr.mxu0 0.0
    %145 = vmatpush2.msra.mxu0 0.0
    %146 = vmatprep.subr.mxu0 0.0
    %147 = vmatpush2.msra.mxu0 0.0
    %148 = vmatprep.subr.mxu0 0.0
    %149 = vmatpush2.msra.mxu0 0.0
    %150 = vmatprep.subr.mxu0 0.0
    %151 = vmatpush2.msra.mxu0 0.0
    %152 = vmatprep.subr.mxu0 0.0
    %153 = vmatpush2.msra.mxu0 0.0
    %154 = vmatprep.subr.mxu0 0.0
    %155 = vmatpush2.msra.mxu0 0.0
    %156 = vmatprep.subr.mxu0 0.0
    %157 = vmatpush2.msra.mxu0 0.0
    %158 = vmatprep.subr.mxu0 0.0
    %159 = vmatpush2.msra.mxu0 0.0
    %160 = vmatprep.mubr.f32.mxu0 0.0
    %161 = vmatmul.mubr.f32.gmra.mxu0 %v95
    %v162 = vpop.f32.mrf.mxu0
    %v163 = vadd.f32 0.0, %v162
    %v164 = vpop.f32.mrf.mxu0
    %165 = vdwg.mxu0
    %166 = vset.pattern.permute.xlu0 1
    %167 = vperm.xlu0 %166, %v87
    %v168 = vpop.permute.xlu0 %167
    %vm169 = vcmp.eq.s32.totalorder %v168, %v89
    %v170 = vsel %vm169, 1, 0
    %v171 = vcvt.s32.f32 %v170
    %172 = vmatprep.subr.mxu0 0.0
    %173 = vmatpush1.msra.mxu0 %v86
    %174 = vmatprep.subr.mxu0 0.0
    %175 = vmatpush1.msra.mxu0 %v85
    %176 = vmatprep.subr.mxu0 0.0
    %177 = vmatpush1.msra.mxu0 %v84
    %178 = vmatprep.subr.mxu0 0.0
    %179 = vmatpush1.msra.mxu0 %v83
    %180 = vmatprep.subr.mxu0 0.0
    %181 = vmatpush1.msra.mxu0 %v82
    %182 = vmatprep.subr.mxu0 0.0
    %183 = vmatpush1.msra.mxu0 %v81
    %184 = vmatprep.subr.mxu0 0.0
    %185 = vmatpush1.msra.mxu0 %v80
    %186 = vmatprep.subr.mxu0 0.0
    %187 = vmatpush1.msra.mxu0 %v79
    %188 = vmatprep.subr.mxu0 0.0
    %189 = vmatpush1.msra.mxu0 %v78
    %190 = vmatprep.subr.mxu0 0.0
    %191 = vmatpush1.msra.mxu0 %v77
    %192 = vmatprep.subr.mxu0 0.0
    %193 = vmatpush1.msra.mxu0 %v76
    %194 = vmatprep.subr.mxu0 0.0
    %195 = vmatpush1.msra.mxu0 %v75
    %196 = vmatprep.subr.mxu0 0.0
    %197 = vmatpush1.msra.mxu0 %v74
    %198 = vmatprep.subr.mxu0 0.0
    %199 = vmatpush1.msra.mxu0 %v73
    %200 = vmatprep.subr.mxu0 0.0
    %201 = vmatpush1.msra.mxu0 %v72
    %202 = vmatprep.subr.mxu0 0.0
    %203 = vmatpush1.msra.mxu0 %v71
    %204 = vmatprep.subr.mxu0 0.0
    %205 = vmatpush2.msra.mxu0 0.0
    %206 = vmatprep.subr.mxu0 0.0
    %207 = vmatpush2.msra.mxu0 0.0
    %208 = vmatprep.subr.mxu0 0.0
    %209 = vmatpush2.msra.mxu0 0.0
    %210 = vmatprep.subr.mxu0 0.0
    %211 = vmatpush2.msra.mxu0 0.0
    %212 = vmatprep.subr.mxu0 0.0
    %213 = vmatpush2.msra.mxu0 0.0
    %214 = vmatprep.subr.mxu0 0.0
    %215 = vmatpush2.msra.mxu0 0.0
    %216 = vmatprep.subr.mxu0 0.0
    %217 = vmatpush2.msra.mxu0 0.0
    %218 = vmatprep.subr.mxu0 0.0
    %219 = vmatpush2.msra.mxu0 0.0
    %220 = vmatprep.subr.mxu0 0.0
    %221 = vmatpush2.msra.mxu0 0.0
    %222 = vmatprep.subr.mxu0 0.0
    %223 = vmatpush2.msra.mxu0 0.0
    %224 = vmatprep.subr.mxu0 0.0
    %225 = vmatpush2.msra.mxu0 0.0
    %226 = vmatprep.subr.mxu0 0.0
    %227 = vmatpush2.msra.mxu0 0.0
    %228 = vmatprep.subr.mxu0 0.0
    %229 = vmatpush2.msra.mxu0 0.0
    %230 = vmatprep.subr.mxu0 0.0
    %231 = vmatpush2.msra.mxu0 0.0
    %232 = vmatprep.subr.mxu0 0.0
    %233 = vmatpush2.msra.mxu0 0.0
    %234 = vmatprep.subr.mxu0 0.0
    %235 = vmatpush2.msra.mxu0 0.0
    %236 = vmatprep.mubr.f32.mxu0 0.0
    %237 = vmatmul.mubr.f32.gmra.mxu0 %v171
    %v238 = vpop.f32.mrf.mxu0
    %v239 = vadd.f32 0.0, %v238
    %v240 = vpop.f32.mrf.mxu0
    %241 = vdwg.mxu0
    %243 = vrot.lane.b32.xlu0 %v239, 32
    %v244 = vpop.permute.xlu0 %243
    %v246 = vsel %vm38, %v163, %v244
    %247 = vst.msk [vmem:[#allocation2 + $0x8] sm:$0xff] %vm40, %v246
    // Predicated region
    $region26: #{tpu_custom_call.1} parent=1 // pred_check
      _
    $region27: #{tpu_custom_call.1} parent=1 // pred_check_branch
      %249 = sbr.rel (0) target = $region29
    $region28: #{tpu_custom_call.1} parent=1 // pred_region
      %s251 = ssub.s32 256, 256
      %252 = vsyncadd [#allocation3], %s251
      %s254 = sshll.u32 [#allocation2], 4
      %s255 = int_to_ptr.vmem [resolvable:$true] %s254
      %257 = dma.vmem_to_hbm [thread:$0]  %s255, 256, %s6, [#allocation3]
    $region29: #{tpu_custom_call.1} parent=1 // pred_fallthru
      _
    // Predicated region
    $region30: #{tpu_custom_call.1} parent=1 // pred_check
      _
    $region31: #{tpu_custom_call.1} parent=1 // pred_check_branch
      %259 = sbr.rel (0) target = $region33
    $region32: #{tpu_custom_call.1} parent=1 // pred_region
      %260 = dma.done [#allocation3], 256
    $region33: #{tpu_custom_call.1} parent=1 // pred_fallthru
      _
    %261 = vsyncpa [#allocation3], 1

</llo_original>
